<compile_context>
chip_gen: v5e
topology: v5e:2x2
jax: 0.10.0
libtpu: 0.0.40
codegen_flags: <defaults>
</compile_context>

<pallas_src>
import math
import jax
import jax.numpy as jnp
from jax import lax
from jax.experimental import pallas as pl
from jax.experimental.pallas import tpu as pltpu


def conv_agg_kernel(src_ref, dst_ref, xt_ref, ht_ref, wt_ref, b_ref,
                    o_ref, hw_ref, acc_ref):
    # grid = (node tiles "parallel", edge tiles "arbitrary"); edge axis is innermost.
    e = pl.program_id(1)
    TN = o_ref.shape[1]                 # node tile (lane axis of acc / output)
    TE = dst_ref.shape[1]               # edge tile (lane axis of the one-hots' columns)
    K = xt_ref.shape[0]
    KC = wt_ref.shape[0]                # K * Cout_padded
    Cout = KC // K
    N_pad = hw_ref.shape[1]
    n_chunks = N_pad // TN

    @pl.when(e == 0)
    def _():
        # hw[k*Cout + o, n] = sum_c W[k, c, o] * h[n, c].  Recomputed per node tile
        # (cheap: KC x Cin x N MACs) so nothing leaks between "parallel" node tiles
        # and the accumulator is re-initialized for every node tile.
        hw_ref[...] = jnp.dot(wt_ref[...], ht_ref[...],
                              preferred_element_type=jnp.float32)        # (KC, N_pad)
        acc_ref[...] = jnp.zeros_like(acc_ref)

    dst = dst_ref[...]                   # (1, TE)  int32, padded edges are -1
    src = src_ref[...]                   # (TE, 1)  int32, padded edges are -1
    x_t = xt_ref[...]                    # (K, TE)  f32

    # ---- Gather hw columns at dst:  hw_d[kc, e] = hw[kc, dst[e]] --------------------
    # Chunked over N so only one (TN, TE) one-hot (+ iota) is live at a time.
    # bf16 one-hots are exact; hw values are rounded to bf16; accumulation stays f32.
    def gather_chunk(j, acc):
        base = pl.multiple_of(j * TN, 128)
        ids = lax.broadcasted_iota(jnp.int32, (TN, TE), 0) + base        # chunk node ids
        oh_dst = (ids == dst).astype(jnp.bfloat16)                       # (TN, TE)
        hw_c = hw_ref[:, pl.ds(base, TN)].astype(jnp.bfloat16)           # (KC, TN)
        return acc + jnp.dot(hw_c, oh_dst, preferred_element_type=jnp.float32)

    hw_d = lax.fori_loop(0, n_chunks, gather_chunk,
                         jnp.zeros((KC, TE), jnp.float32),
                         unroll=n_chunks <= 8)                           # (KC, TE)

    # ---- Per-edge contributions, all K blocks kept on sublanes (wide MXU LHS) -------
    # c[k*Cout + o, e] = X[e, k] * hw[k*Cout + o, dst[e]]   (Cout padded to 8 => aligned)
    parts = [x_t[k:k + 1, :] * hw_d[k * Cout:(k + 1) * Cout, :] for k in range(K)]
    c = parts[0] if K == 1 else jnp.concatenate(parts, axis=0)           # (KC, TE)

    # ---- Scatter-add into src columns of this node tile ----------------------------
    base_n = pl.program_id(0) * TN
    ids_n = lax.broadcasted_iota(jnp.int32, (TE, TN), 1) + base_n
    oh_src = (ids_n == src).astype(jnp.bfloat16)                         # (TE, TN)
    acc_ref[...] += jnp.dot(c.astype(jnp.bfloat16), oh_src,
                            preferred_element_type=jnp.float32)          # (KC, TN)

    @pl.when(e == pl.num_programs(1) - 1)
    def _():
        red = acc_ref[0:Cout, :]
        for k in range(1, K):                                            # reduce over k once
            red = red + acc_ref[k * Cout:(k + 1) * Cout, :]
        o_ref[...] = (red + b_ref[...]).astype(o_ref.dtype)


def _round_up(x, m):
    return ((x + m - 1) // m) * m


def conv_agg_pallas(src, dst, x_edges, h, weight, bias, *, node_tile=512, edge_tile=256):
    """src/dst: (E,) int32; x_edges: (E, K) f32 (already dedup-masked);
    h: (N, Cin); weight: (K, Cin, Cout); bias: (Cout,).  Returns (N, Cout) f32."""
    E, K = x_edges.shape
    N, Cin = h.shape
    Cout = weight.shape[2]

    # Pad Cout to a multiple of 8 so every per-k sublane slice is (8,128)-aligned.
    Cout_p = _round_up(Cout, 8)
    KC = K * Cout_p

    # Tile sizes (lane axes => multiples of 128), shrink-to-fit for small problems.
    # v7x (64 MiB VMEM) default stays modest; sweep node_tile/edge_tile per generation.
    tn = min(max(128, (node_tile // 128) * 128), _round_up(N, 128))
    te = min(max(128, (edge_tile // 128) * 128), _round_up(E, 128))
    N_pad = _round_up(N, tn)
    E_pad = _round_up(E, te)

    # Host-side packing: nodes / edges on the 128-lane axis, channels on sublanes.
    src_p = jnp.pad(src.astype(jnp.int32), (0, E_pad - E), constant_values=-1)
    dst_p = jnp.pad(dst.astype(jnp.int32), (0, E_pad - E), constant_values=-1)
    src_col = src_p.reshape(E_pad, 1)                                    # (E_pad, 1)
    dst_row = dst_p.reshape(1, E_pad)                                    # (1, E_pad)
    xt_p = jnp.pad(x_edges.astype(jnp.float32).T, ((0, 0), (0, E_pad - E)))   # (K, E_pad)
    h_t = jnp.pad(h.astype(jnp.float32).T, ((0, 0), (0, N_pad - N)))     # (Cin, N_pad)
    w_p = jnp.pad(weight.astype(jnp.float32), ((0, 0), (0, 0), (0, Cout_p - Cout)))
    w_t = jnp.transpose(w_p, (0, 2, 1)).reshape(KC, Cin)                 # (KC, Cin), k-major
    b_col = jnp.pad(bias.astype(jnp.float32), (0, Cout_p - Cout)).reshape(Cout_p, 1)

    # TODO(synk): for very large graphs, pre-sort edges by src tile and use scalar
    # prefetch (PrefetchScalarGridSpec) so each edge tile is visited by exactly one
    # node tile instead of every node tile re-scanning all edges.
    grid = (N_pad // tn, E_pad // te)     # node tiles parallel, edge tiles = reduction
    out_t = pl.pallas_call(
        conv_agg_kernel,
        out_shape=jax.ShapeDtypeStruct((Cout_p, N_pad), jnp.float32),
        grid_spec=pltpu.PrefetchScalarGridSpec(
            num_scalar_prefetch=0,
            grid=grid,
            in_specs=[
                pl.BlockSpec((te, 1), lambda n, e: (e, 0)),        # src ids (column)
                pl.BlockSpec((1, te), lambda n, e: (0, e)),        # dst ids (row)
                pl.BlockSpec((K, te), lambda n, e: (0, e)),        # X^T edge-value tile
                pl.BlockSpec((Cin, N_pad), lambda n, e: (0, 0)),   # h^T, resident
                pl.BlockSpec((KC, Cin), lambda n, e: (0, 0)),      # W^T (k-major), resident
                pl.BlockSpec((Cout_p, 1), lambda n, e: (0, 0)),    # bias column, resident
            ],
            out_specs=pl.BlockSpec((Cout_p, tn), lambda n, e: (n, 0)),
            scratch_shapes=[
                pltpu.VMEM((KC, N_pad), jnp.float32),   # hw = W^T @ h^T (all k, full N)
                pltpu.VMEM((KC, tn), jnp.float32),      # f32 accumulator for this node tile
            ],
        ),
        compiler_params=pltpu.CompilerParams(
            dimension_semantics=("parallel", "arbitrary")),
    )(src_col, dst_row, xt_p, h_t, w_t, b_col)
    return out_t[:Cout, :N].T                                            # (N, Cout)


def conv_agg_forward(h, X, edge_index, batch_node, weight, bias):
    """Mirrors Conv_agg.forward without ever building the dense (K, N, N) resx."""
    E = X.shape[0]
    src = edge_index[0].astype(jnp.int32)
    dst = edge_index[1].astype(jnp.int32)

    # torch's `resx[:, src, dst] = X.T` is last-write-wins on duplicate (src, dst)
    # pairs, while the fused segment-sum would accumulate them: keep only the last
    # occurrence of each pair.  Lexsort on (src, dst, original index) avoids the
    # int32 overflow of the old src*N+dst encoding for large N.
    idx = jnp.arange(E, dtype=jnp.int32)
    order = jnp.lexsort((idx, dst, src))
    src_s, dst_s = src[order], dst[order]
    diff_next = (src_s[1:] != src_s[:-1]) | (dst_s[1:] != dst_s[:-1])
    is_last = jnp.concatenate([diff_next, jnp.array([True])])
    keep = jnp.zeros((E,), dtype=bool).at[order].set(is_last)
    x_eff = jnp.where(keep[:, None], X.astype(jnp.float32), 0.0)

    return conv_agg_pallas(src, dst, x_eff, h, weight, bias)


def reference_forward(h, X, edge_index, batch_node, weight, bias):
    K = weight.shape[0]
    N = batch_node.shape[0]
    resx = jnp.zeros((K, N, N), dtype=jnp.float32)
    resx = resx.at[:, edge_index[0], edge_index[1]].set(X.T)
    res = jnp.einsum('kij,jc->kic', resx, h)
    res = jnp.einsum('kic,kco->io', res, weight)
    return res + bias


if __name__ == "__main__":
    key = jax.random.PRNGKey(0)
    K, Cin, Cout = 2, 4, 8          # K filters, in_channels=4, out_channels=8
    N, E = 16, 24                   # N nodes, E edges

    k1, k2, k3, k4 = jax.random.split(key, 4)

    # Deterministic parameter init matching Conv_agg.reset_parameters():
    # glorot uniform on weight (K, Cin, Cout), zeros on bias (Cout,)
    stdv = math.sqrt(6.0 / (Cin + Cout))
    weight = jax.random.uniform(k1, (K, Cin, Cout), jnp.float32, -stdv, stdv)
    bias = jnp.zeros((Cout,), jnp.float32)

    # Forward inputs: h (N, Cin) node features, X (E, K) edge values,
    # edge_index (2, E) int indices, batch_node (N,) (only its shape is used).
    h = jax.random.normal(k2, (N, Cin), jnp.float32)
    X = jax.random.normal(k3, (E, K), jnp.float32)
    # Unique (src, dst) pairs so the self-test is unambiguous (JAX's dense scatter is
    # unspecified on duplicates, torch's is last-write; the kernel does last-write).
    pair = jax.random.permutation(k4, N * N)[:E]
    edge_index = jnp.stack([(pair // N).astype(jnp.int32),
                            (pair % N).astype(jnp.int32)], axis=0)
    batch_node = jnp.zeros((N,), jnp.float32)

    out = conv_agg_forward(h, X, edge_index, batch_node, weight, bias)
    out = jax.block_until_ready(out)

    ref = reference_forward(h, X, edge_index, batch_node, weight, bias)
    assert out.shape == (N, Cout)
    err = float(jnp.max(jnp.abs(out - ref)))
    # bf16 MXU operands (one-hots exact; hw / per-edge values rounded) => ~1e-3 abs error.
    assert jnp.allclose(out, ref, atol=3e-2, rtol=3e-2), err
    print("KERNEL_OK")
</pallas_src>

<mosaic_0001>
module attributes {stable_mosaic.version = 11 : i64} {
  func.func @conv_agg_kernel(%arg0: i32, %arg1: i32, %arg2: memref<128x1xi32, #tpu.memory_space<vmem>>, %arg3: memref<1x128xi32, #tpu.memory_space<vmem>>, %arg4: memref<2x128xf32, #tpu.memory_space<vmem>>, %arg5: memref<4x128xf32, #tpu.memory_space<vmem>>, %arg6: memref<16x4xf32, #tpu.memory_space<vmem>>, %arg7: memref<8x1xf32, #tpu.memory_space<vmem>>, %arg8: memref<8x128xf32, #tpu.memory_space<vmem>>, %arg9: memref<16x128xf32, #tpu.memory_space<vmem>>, %arg10: memref<16x128xf32, #tpu.memory_space<vmem>>) attributes {dimension_semantics = [#tpu.dimension_semantics<parallel>, #tpu.dimension_semantics<arbitrary>], iteration_bounds = array<i64: 1, 1>, scalar_prefetch = 0 : i64, scratch_operands = 2 : i64, tpu.core_type = #tpu.core_type<tc>, window_params = [{transform_indices = @transform_0, window_bounds = array<i64: 128, 1>}, {transform_indices = @transform_1, window_bounds = array<i64: 1, 128>}, {transform_indices = @transform_2, window_bounds = array<i64: 2, 128>}, {pipeline_mode = #tpu.pipeline_mode<synchronous>, transform_indices = @transform_3, window_bounds = array<i64: 4, 128>}, {pipeline_mode = #tpu.pipeline_mode<synchronous>, transform_indices = @transform_4, window_bounds = array<i64: 16, 4>}, {pipeline_mode = #tpu.pipeline_mode<synchronous>, transform_indices = @transform_5, window_bounds = array<i64: 8, 1>}, {transform_indices = @transform_6, window_bounds = array<i64: 8, 128>}]} {
    %c0_i32 = arith.constant 0 : i32
    %0 = arith.cmpi eq, %arg1, %c0_i32 : i32
    %1 = arith.extui %0 : i1 to i32
    %c0_i32_0 = arith.constant 0 : i32
    %2 = arith.cmpi ne, %1, %c0_i32_0 : i32
    scf.if %2 {
      %c0_17 = arith.constant 0 : index
      %c0_18 = arith.constant 0 : index
      %48 = vector.load %arg6[%c0_17, %c0_18] : memref<16x4xf32, #tpu.memory_space<vmem>>, vector<16x4xf32>
      %c0_19 = arith.constant 0 : index
      %c0_20 = arith.constant 0 : index
      %49 = vector.load %arg5[%c0_19, %c0_20] : memref<4x128xf32, #tpu.memory_space<vmem>>, vector<4x128xf32>
      %cst_21 = arith.constant dense<0.000000e+00> : vector<16x128xf32>
      %50 = tpu.matmul %48, %49, %cst_21 {dimension_numbers = #tpu.dot_dimension_numbers<[1], [0], [0], [1], [0, 0, 1, 1], [], []>} : vector<16x4xf32>, vector<4x128xf32>, vector<16x128xf32> -> vector<16x128xf32>
      %c0_22 = arith.constant 0 : index
      %c0_23 = arith.constant 0 : index
      %51 = vector.load %arg9[%c0_22, %c0_23] : memref<16x128xf32, #tpu.memory_space<vmem>>, vector<16x128xf32>
      tpu.vector_store %arg9[%c0_22, %c0_23], %50 {strides = array<i32>} : memref<16x128xf32, #tpu.memory_space<vmem>>, vector<16x128xf32>,
      %cst_24 = arith.constant 0.000000e+00 : f32
      %52 = vector.broadcast %cst_24 : f32 to vector<16x128xf32>
      %c0_25 = arith.constant 0 : index
      %c0_26 = arith.constant 0 : index
      %53 = vector.load %arg10[%c0_25, %c0_26] : memref<16x128xf32, #tpu.memory_space<vmem>>, vector<16x128xf32>
      tpu.vector_store %arg10[%c0_25, %c0_26], %52 {strides = array<i32>} : memref<16x128xf32, #tpu.memory_space<vmem>>, vector<16x128xf32>,
    } else {
    }
    %c0 = arith.constant 0 : index
    %c0_1 = arith.constant 0 : index
    %3 = vector.load %arg3[%c0, %c0_1] : memref<1x128xi32, #tpu.memory_space<vmem>>, vector<1x128xi32>
    %c0_2 = arith.constant 0 : index
    %c0_3 = arith.constant 0 : index
    %4 = vector.load %arg2[%c0_2, %c0_3] : memref<128x1xi32, #tpu.memory_space<vmem>>, vector<128x1xi32>
    %c0_4 = arith.constant 0 : index
    %c0_5 = arith.constant 0 : index
    %5 = vector.load %arg4[%c0_4, %c0_5] : memref<2x128xf32, #tpu.memory_space<vmem>>, vector<2x128xf32>
    %cst = arith.constant 0.000000e+00 : f32
    %6 = vector.broadcast %cst : f32 to vector<16x128xf32>
    %c0_i32_6 = arith.constant 0 : i32
    %c128_i32 = arith.constant 128 : i32
    %7 = arith.muli %c0_i32_6, %c128_i32 : i32
    %8 = tpu.assume_multiple %7, 128 : i32
    %9 = tpu.iota {dimensions = array<i32: 0>} : vector<128x128xi32>
    %10 = vector.broadcast %8 : i32 to vector<128x128xi32>
    %11 = arith.addi %9, %10 : vector<128x128xi32>
    %12 = vector.broadcast %3 : vector<1x128xi32> to vector<128x128xi32>
    %13 = arith.cmpi eq, %11, %12 : vector<128x128xi32>
    %14 = arith.extui %13 : vector<128x128xi1> to vector<128x128xi32>
    %15 = arith.sitofp %14 : vector<128x128xi32> to vector<128x128xf32>
    %16 = arith.truncf %15 : vector<128x128xf32> to vector<128x128xbf16>
    %c0_7 = arith.constant 0 : index
    %17 = arith.index_cast %8 : i32 to index
    %18 = vector.load %arg9[%c0_7, %17] : memref<16x128xf32, #tpu.memory_space<vmem>>, vector<16x128xf32>
    %19 = arith.truncf %18 : vector<16x128xf32> to vector<16x128xbf16>
    %cst_8 = arith.constant dense<0.000000e+00> : vector<16x128xf32>
    %20 = tpu.matmul %19, %16, %cst_8 {dimension_numbers = #tpu.dot_dimension_numbers<[1], [0], [0], [1], [0, 0, 1, 1], [], []>} : vector<16x128xbf16>, vector<128x128xbf16>, vector<16x128xf32> -> vector<16x128xf32>
    %21 = arith.addf %6, %20 : vector<16x128xf32>
    %c1_i32 = arith.constant 1 : i32
    %22 = vector.extract_strided_slice %5 {offsets = [0, 0], sizes = [1, 128], strides = [1, 1]} : vector<2x128xf32> to vector<1x128xf32>
    %23 = vector.extract_strided_slice %21 {offsets = [0, 0], sizes = [8, 128], strides = [1, 1]} : vector<16x128xf32> to vector<8x128xf32>
    %24 = vector.broadcast %22 : vector<1x128xf32> to vector<8x128xf32>
    %25 = arith.mulf %24, %23 : vector<8x128xf32>
    %26 = vector.extract_strided_slice %5 {offsets = [1, 0], sizes = [1, 128], strides = [1, 1]} : vector<2x128xf32> to vector<1x128xf32>
    %27 = vector.extract_strided_slice %21 {offsets = [8, 0], sizes = [8, 128], strides = [1, 1]} : vector<16x128xf32> to vector<8x128xf32>
    %28 = vector.broadcast %26 : vector<1x128xf32> to vector<8x128xf32>
    %29 = arith.mulf %28, %27 : vector<8x128xf32>
    %30 = tpu.concatenate %25, %29 in 0 : vector<8x128xf32>, vector<8x128xf32> -> vector<16x128xf32>
    %c128_i32_9 = arith.constant 128 : i32
    %31 = arith.muli %arg0, %c128_i32_9 : i32
    %32 = tpu.iota {dimensions = array<i32: 1>} : vector<128x128xi32>
    %33 = vector.broadcast %31 : i32 to vector<128x128xi32>
    %34 = arith.addi %32, %33 : vector<128x128xi32>
    %35 = vector.broadcast %4 : vector<128x1xi32> to vector<128x128xi32>
    %36 = arith.cmpi eq, %34, %35 : vector<128x128xi32>
    %37 = arith.extui %36 : vector<128x128xi1> to vector<128x128xi32>
    %38 = arith.sitofp %37 : vector<128x128xi32> to vector<128x128xf32>
    %39 = arith.truncf %38 : vector<128x128xf32> to vector<128x128xbf16>
    %c0_10 = arith.constant 0 : index
    %c0_11 = arith.constant 0 : index
    %40 = vector.load %arg10[%c0_10, %c0_11] : memref<16x128xf32, #tpu.memory_space<vmem>>, vector<16x128xf32>
    %41 = arith.truncf %30 : vector<16x128xf32> to vector<16x128xbf16>
    %cst_12 = arith.constant dense<0.000000e+00> : vector<16x128xf32>
    %42 = tpu.matmul %41, %39, %cst_12 {dimension_numbers = #tpu.dot_dimension_numbers<[1], [0], [0], [1], [0, 0, 1, 1], [], []>} : vector<16x128xbf16>, vector<128x128xbf16>, vector<16x128xf32> -> vector<16x128xf32>
    %43 = arith.addf %40, %42 : vector<16x128xf32>
    %c0_13 = arith.constant 0 : index
    %c0_14 = arith.constant 0 : index
    %44 = vector.load %arg10[%c0_13, %c0_14] : memref<16x128xf32, #tpu.memory_space<vmem>>, vector<16x128xf32>
    tpu.vector_store %arg10[%c0_13, %c0_14], %43 {strides = array<i32>} : memref<16x128xf32, #tpu.memory_space<vmem>>, vector<16x128xf32>,
    %c0_i32_15 = arith.constant 0 : i32
    %45 = arith.cmpi eq, %arg1, %c0_i32_15 : i32
    %46 = arith.extui %45 : i1 to i32
    %c0_i32_16 = arith.constant 0 : i32
    %47 = arith.cmpi ne, %46, %c0_i32_16 : i32
    scf.if %47 {
      %c0_17 = arith.constant 0 : index
      %c0_18 = arith.constant 0 : index
      %48 = vector.load %arg10[%c0_17, %c0_18] : memref<16x128xf32, #tpu.memory_space<vmem>>, vector<8x128xf32>
      %c8 = arith.constant 8 : index
      %c0_19 = arith.constant 0 : index
      %49 = vector.load %arg10[%c8, %c0_19] : memref<16x128xf32, #tpu.memory_space<vmem>>, vector<8x128xf32>
      %50 = arith.addf %48, %49 : vector<8x128xf32>
      %c0_20 = arith.constant 0 : index
      %c0_21 = arith.constant 0 : index
      %51 = vector.load %arg7[%c0_20, %c0_21] : memref<8x1xf32, #tpu.memory_space<vmem>>, vector<8x1xf32>
      %52 = vector.broadcast %51 : vector<8x1xf32> to vector<8x128xf32>
      %53 = arith.addf %50, %52 : vector<8x128xf32>
      %c0_22 = arith.constant 0 : index
      %c0_23 = arith.constant 0 : index
      %54 = vector.load %arg8[%c0_22, %c0_23] : memref<8x128xf32, #tpu.memory_space<vmem>>, vector<8x128xf32>
      tpu.vector_store %arg8[%c0_22, %c0_23], %53 {strides = array<i32>} : memref<8x128xf32, #tpu.memory_space<vmem>>, vector<8x128xf32>,
    } else {
    }
    return
  }
  func.func @transform_0(%arg0: i32, %arg1: i32) -> (i32, i32) {
    %c0_i32 = arith.constant 0 : i32
    %c0_i32_0 = arith.constant 0 : i32
    return %arg1, %c0_i32 : i32, i32
  }
  func.func @transform_1(%arg0: i32, %arg1: i32) -> (i32, i32) {
    %c0_i32 = arith.constant 0 : i32
    %c0_i32_0 = arith.constant 0 : i32
    return %c0_i32, %arg1 : i32, i32
  }
  func.func @transform_2(%arg0: i32, %arg1: i32) -> (i32, i32) {
    %c0_i32 = arith.constant 0 : i32
    %c0_i32_0 = arith.constant 0 : i32
    return %c0_i32, %arg1 : i32, i32
  }
  func.func @transform_3(%arg0: i32, %arg1: i32) -> (i32, i32) {
    %c0_i32 = arith.constant 0 : i32
    %c0_i32_0 = arith.constant 0 : i32
    %c0_i32_1 = arith.constant 0 : i32
    return %c0_i32, %c0_i32_0 : i32, i32
  }
  func.func @transform_4(%arg0: i32, %arg1: i32) -> (i32, i32) {
    %c0_i32 = arith.constant 0 : i32
    %c0_i32_0 = arith.constant 0 : i32
    %c0_i32_1 = arith.constant 0 : i32
    return %c0_i32, %c0_i32_0 : i32, i32
  }
  func.func @transform_5(%arg0: i32, %arg1: i32) -> (i32, i32) {
    %c0_i32 = arith.constant 0 : i32
    %c0_i32_0 = arith.constant 0 : i32
    %c0_i32_1 = arith.constant 0 : i32
    return %c0_i32, %c0_i32_0 : i32, i32
  }
  func.func @transform_6(%arg0: i32, %arg1: i32) -> (i32, i32) {
    %c0_i32 = arith.constant 0 : i32
    %c0_i32_0 = arith.constant 0 : i32
    return %arg0, %c0_i32 : i32, i32
  }
}

</mosaic_0001>

<llo_original>
// kernel: tpu_custom_call.1
$region0: #{tpu_custom_call.1}
  #allocation0 [shape = 'u32[]', space=smem, size = 0x4, offset = 0x4, fixed_abs, tag = 'smem constant byte address 0x4 - core index']
  #allocation1 [shape = 'u32[72,128]{1,0:T(1,128)}', space=vmem, size = 0x9000, scoped, tag = 'internal scratch']
  #allocation2 [shape = 'f32[16,128]{1,0:T(8,128)}', space=vmem, size = 0x2000, scoped, tag = 'scratch operand']
  #allocation3 [shape = 'f32[16,128]{1,0:T(8,128)}', space=vmem, size = 0x2000, scoped, tag = 'scratch operand']
  %s0 = inlined_call_operand.vmem [shape: s32[128,1], index: 0, kind: input, shape index: {}]
  %s1 = inlined_call_operand.vmem [shape: s32[1,128], index: 1, kind: input, shape index: {}]
  %s2 = inlined_call_operand.vmem [shape: f32[2,128], index: 2, kind: input, shape index: {}]
  %s3 = inlined_call_operand.vmem [shape: f32[4,128], index: 3, kind: input, shape index: {}]
  %s4 = inlined_call_operand.vmem [shape: f32[16,4], index: 4, kind: input, shape index: {}]
  %s5 = inlined_call_operand.vmem [shape: f32[8,1], index: 5, kind: input, shape index: {}]
  %s6 = inlined_call_operand.hbm [shape: f32[8,128], index: 6, kind: output, shape index: {}]
  %s7 = sld [smem:[#allocation0]]
  $region42: #{tpu_custom_call.1} parent=0
    _
  %s9 = ssub.s32 1, %s7
  %s10 = scalar_select 0, %s9, %s7
  $region1: #{tpu_custom_call.1} parent=0
    #allocation4 [shape = 'u8[4096]{0}', space=vmem, size = 0x1000, scoped, tag = 'output window, operand 0, single buffered']
    #allocation5 [shape = 's32[1]{0}', space=sflag, size = 0x4, scoped, tag = 'scoped memory for tpu_custom_call.1']
    %11 = vsyncpa [#allocation5], 0
    // Predicated region
    $region2: #{tpu_custom_call.1} parent=1 // pred_check
      _
    $region3: #{tpu_custom_call.1} parent=1 // pred_check_branch
      %13 = sbr.rel (0) target = $region5
    $region4: #{tpu_custom_call.1} parent=1 // pred_region
      _
    $region5: #{tpu_custom_call.1} parent=1 // pred_fallthru
      _
    // Predicated region
    $region6: #{tpu_custom_call.1} parent=1 // pred_check
      _
    $region7: #{tpu_custom_call.1} parent=1 // pred_check_branch
      %15 = sbr.rel (0) target = $region9
    $region8: #{tpu_custom_call.1} parent=1 // pred_region
      _
    $region9: #{tpu_custom_call.1} parent=1 // pred_fallthru
      _
    // Predicated region
    $region10: #{tpu_custom_call.1} parent=1 // pred_check
      _
    $region11: #{tpu_custom_call.1} parent=1 // pred_check_branch
      %17 = sbr.rel (0) target = $region13
    $region12: #{tpu_custom_call.1} parent=1 // pred_region
      _
    $region13: #{tpu_custom_call.1} parent=1 // pred_fallthru
      _
    // Predicated region
    $region14: #{tpu_custom_call.1} parent=1 // pred_check
      _
    $region15: #{tpu_custom_call.1} parent=1 // pred_check_branch
      %19 = sbr.rel (0) target = $region17
    $region16: #{tpu_custom_call.1} parent=1 // pred_region
      _
    $region17: #{tpu_custom_call.1} parent=1 // pred_fallthru
      _
    // Predicated region
    $region18: #{tpu_custom_call.1} parent=1 // pred_check
      _
    $region19: #{tpu_custom_call.1} parent=1 // pred_check_branch
      %21 = sbr.rel (0) target = $region21
    $region20: #{tpu_custom_call.1} parent=1 // pred_region
      _
    $region21: #{tpu_custom_call.1} parent=1 // pred_fallthru
      _
    // Predicated region
    $region22: #{tpu_custom_call.1} parent=1 // pred_check
      _
    $region23: #{tpu_custom_call.1} parent=1 // pred_check_branch
      %23 = sbr.rel (0) target = $region25
    $region24: #{tpu_custom_call.1} parent=1 // pred_region
      _
    $region25: #{tpu_custom_call.1} parent=1 // pred_fallthru
      _
    %p24 = scmp.eq.s32.totalorder 0, 0
    // Predicated region
    $region26: #{tpu_custom_call.1} parent=1 // pred_check
      %p25 = pneg %p24
    $region27: #{tpu_custom_call.1} parent=1 // pred_check_branch
      %27 = sbr.rel (%p25) target = $region29
    $region28: #{tpu_custom_call.1} parent=1 // pred_region
      %v28 = vld [vmem:[%s4] sm:$0xff]
      %v29 = vld [vmem:[%s4 + $0x8] sm:$0xff]
      %v30 = vld [vmem:[%s3] sm:$0xf]
      %vm31 = vcmask 31744
      %v33 = vsel %vm31, %v28, 0
      %v36 = vsel %vm31, %v29, 0
      %vm38 = vcmask 1043456
      %v40 = vsel %vm38, %v30, 0
      %42 = vmatpush.msra.mxu0 0.0
      %43 = vmatpush.msra.mxu0 0.0
      %44 = vmatpush.msra.mxu0 0.0
      %45 = vmatpush.msra.mxu0 0.0
      %46 = vmatpush.msra.mxu0 0.0
      %47 = vmatpush.msra.mxu0 0.0
      %48 = vmatpush.msra.mxu0 0.0
      %49 = vmatpush.msra.mxu0 0.0
      %50 = vmatpush.msra.mxu0 0.0
      %51 = vmatpush.msra.mxu0 0.0
      %52 = vmatpush.msra.mxu0 0.0
      %53 = vmatpush.msra.mxu0 0.0
      %54 = vmatpush.msra.mxu0 0.0
      %55 = vmatpush.msra.mxu0 0.0
      %56 = vmatpush.msra.mxu0 0.0
      %57 = vmatpush.msra.mxu0 %v40
      %58 = vmatmul.f32.gmra.mxu0 %v33
      %v59 = vpop.f32.mrf.mxu0
      %v60 = vadd.f32 0.0, %v59
      %61 = vmatmul.f32.gmra.mxu0 %v36
      %v62 = vpop.f32.mrf.mxu0
      %v63 = vadd.f32 0.0, %v62
      %64 = vdwg.mxu0
      %65 = vst [vmem:[#allocation2] sm:$0xff] %v60
      %66 = vst [vmem:[#allocation2 + $0x8] sm:$0xff] %v63
      %67 = vst [vmem:[#allocation3] sm:$0xff] 0.0
      %68 = vst [vmem:[#allocation3 + $0x8] sm:$0xff] 0.0
    $region29: #{tpu_custom_call.1} parent=1 // pred_fallthru
      _
    %v69 = vld [vmem:[%s1] sm:$0x1]
    %v70 = vld [vmem:[%s0] sm:$0xff]
    %v71 = vld [vmem:[%s0 + $0x8] sm:$0xff]
    %v72 = vld [vmem:[%s0 + $0x10] sm:$0xff]
    %v73 = vld [vmem:[%s0 + $0x18] sm:$0xff]
    %v74 = vld [vmem:[%s0 + $0x20] sm:$0xff]
    %v75 = vld [vmem:[%s0 + $0x28] sm:$0xff]
    %v76 = vld [vmem:[%s0 + $0x30] sm:$0xff]
    %v77 = vld [vmem:[%s0 + $0x38] sm:$0xff]
    %v78 = vld [vmem:[%s0 + $0x40] sm:$0xff]
    %v79 = vld [vmem:[%s0 + $0x48] sm:$0xff]
    %v80 = vld [vmem:[%s0 + $0x50] sm:$0xff]
    %v81 = vld [vmem:[%s0 + $0x58] sm:$0xff]
    %v82 = vld [vmem:[%s0 + $0x60] sm:$0xff]
    %v83 = vld [vmem:[%s0 + $0x68] sm:$0xff]
    %v84 = vld [vmem:[%s0 + $0x70] sm:$0xff]
    %v85 = vld [vmem:[%s0 + $0x78] sm:$0xff]
    %v86 = vld [vmem:[%s2] sm:$0x3]
    %v87 = vlaneseq
    %v88 = vshrl.u32 %v87, 7
    %v89 = vadd.s32 %v88, 8
    %v90 = vadd.s32 %v88, 16
    %v91 = vadd.s32 %v88, 24
    %v92 = vadd.s32 %v88, 32
    %v93 = vadd.s32 %v88, 40
    %v94 = vadd.s32 %v88, 48
    %v95 = vadd.s32 %v88, 56
    %v96 = vadd.s32 %v88, 64
    %v97 = vadd.s32 %v88, 72
    %v98 = vadd.s32 %v88, 80
    %v99 = vadd.s32 %v88, 88
    %v100 = vadd.s32 %v88, 96
    %v101 = vadd.s32 %v88, 104
    %v102 = vadd.s32 %v88, 112
    %v103 = vadd.s32 %v88, 120
    %v104 = vstv 0
    %v105 = vadd.s32 %v88, %v104
    %v106 = vadd.s32 %v89, %v104
    %v107 = vadd.s32 %v90, %v104
    %v108 = vadd.s32 %v91, %v104
    %v109 = vadd.s32 %v92, %v104
    %v110 = vadd.s32 %v93, %v104
    %v111 = vadd.s32 %v94, %v104
    %v112 = vadd.s32 %v95, %v104
    %v113 = vadd.s32 %v96, %v104
    %v114 = vadd.s32 %v97, %v104
    %v115 = vadd.s32 %v98, %v104
    %v116 = vadd.s32 %v99, %v104
    %v117 = vadd.s32 %v100, %v104
    %v118 = vadd.s32 %v101, %v104
    %v119 = vadd.s32 %v102, %v104
    %v120 = vadd.s32 %v103, %v104
    %v121 = vperm.slane %v69, 0
    %vm122 = vcmp.eq.s32.totalorder %v105, %v121
    %vm123 = vcmp.eq.s32.totalorder %v106, %v121
    %vm124 = vcmp.eq.s32.totalorder %v107, %v121
    %vm125 = vcmp.eq.s32.totalorder %v108, %v121
    %vm126 = vcmp.eq.s32.totalorder %v109, %v121
    %vm127 = vcmp.eq.s32.totalorder %v110, %v121
    %vm128 = vcmp.eq.s32.totalorder %v111, %v121
    %vm129 = vcmp.eq.s32.totalorder %v112, %v121
    %vm130 = vcmp.eq.s32.totalorder %v113, %v121
    %vm131 = vcmp.eq.s32.totalorder %v114, %v121
    %vm132 = vcmp.eq.s32.totalorder %v115, %v121
    %vm133 = vcmp.eq.s32.totalorder %v116, %v121
    %vm134 = vcmp.eq.s32.totalorder %v117, %v121
    %vm135 = vcmp.eq.s32.totalorder %v118, %v121
    %vm136 = vcmp.eq.s32.totalorder %v119, %v121
    %vm137 = vcmp.eq.s32.totalorder %v120, %v121
    %v138 = vsel %vm122, 1, 0
    %v139 = vsel %vm123, 1, 0
    %v140 = vsel %vm124, 1, 0
    %v141 = vsel %vm125, 1, 0
    %v142 = vsel %vm126, 1, 0
    %v143 = vsel %vm127, 1, 0
    %v144 = vsel %vm128, 1, 0
    %v145 = vsel %vm129, 1, 0
    %v146 = vsel %vm130, 1, 0
    %v147 = vsel %vm131, 1, 0
    %v148 = vsel %vm132, 1, 0
    %v149 = vsel %vm133, 1, 0
    %v150 = vsel %vm134, 1, 0
    %v151 = vsel %vm135, 1, 0
    %v152 = vsel %vm136, 1, 0
    %v153 = vsel %vm137, 1, 0
    %v154 = vcvt.s32.f32 %v138
    %v155 = vcvt.s32.f32 %v139
    %v156 = vcvt.s32.f32 %v140
    %v157 = vcvt.s32.f32 %v141
    %v158 = vcvt.s32.f32 %v142
    %v159 = vcvt.s32.f32 %v143
    %v160 = vcvt.s32.f32 %v144
    %v161 = vcvt.s32.f32 %v145
    %v162 = vcvt.s32.f32 %v146
    %v163 = vcvt.s32.f32 %v147
    %v164 = vcvt.s32.f32 %v148
    %v165 = vcvt.s32.f32 %v149
    %v166 = vcvt.s32.f32 %v150
    %v167 = vcvt.s32.f32 %v151
    %v168 = vcvt.s32.f32 %v152
    %v169 = vcvt.s32.f32 %v153
    %v170 = vpack.c.bf16 %v155, %v154
    %v171 = vpack.c.bf16 %v157, %v156
    %v172 = vpack.c.bf16 %v159, %v158
    %v173 = vpack.c.bf16 %v161, %v160
    %v174 = vpack.c.bf16 %v163, %v162
    %v175 = vpack.c.bf16 %v165, %v164
    %v176 = vpack.c.bf16 %v167, %v166
    %v177 = vpack.c.bf16 %v169, %v168
    %v178 = vld [vmem:[#allocation2] sm:$0xff]
    %v179 = vld [vmem:[#allocation2 + $0x8] sm:$0xff]
    %v180 = vpack.c.bf16 %v179, %v178
    %181 = vmatpush.bf16.msra.mxu0 %v177
    %182 = vmatpush.bf16.msra.mxu0 %v176
    %183 = vmatpush.bf16.msra.mxu0 %v175
    %184 = vmatpush.bf16.msra.mxu0 %v174
    %185 = vmatpush.bf16.msra.mxu0 %v173
    %186 = vmatpush.bf16.msra.mxu0 %v172
    %187 = vmatpush.bf16.msra.mxu0 %v171
    %188 = vmatpush.bf16.msra.mxu0 %v170
    %189 = vmatmul.bf16.gmra.mxu0 %v180
    %v190 = vpop.f32.mrf.mxu0
    %v191 = vadd.f32 0.0, %v190
    %v192 = vpop.f32.mrf.mxu0
    %v193 = vadd.f32 0.0, %v192
    %194 = vdwg.mxu0
    %v195 = vperm.slane %v86, 0
    %v196 = vmul.f32 %v195, %v191
    %v197 = vperm.slane %v86, 1
    %v198 = vmul.f32 %v197, %v193
    %s199 = smul.u32 0, 128
    %v200 = vlaneseq
    %v201 = vand.u32 %v200, 127
    %v202 = vstv %s199
    %v203 = vadd.s32 %v201, %v202
    %204 = vset.pattern.permute.xlu0 0
    %205 = vperm.xlu0 %204, %v70
    %v206 = vpop.permute.xlu0 %205
    %207 = vset.pattern.permute.xlu0 0
    %208 = vperm.xlu0 %207, %v71
    %v209 = vpop.permute.xlu0 %208
    %210 = vset.pattern.permute.xlu0 0
    %211 = vperm.xlu0 %210, %v72
    %v212 = vpop.permute.xlu0 %211
    %213 = vset.pattern.permute.xlu0 0
    %214 = vperm.xlu0 %213, %v73
    %v215 = vpop.permute.xlu0 %214
    %216 = vset.pattern.permute.xlu0 0
    %217 = vperm.xlu0 %216, %v74
    %v218 = vpop.permute.xlu0 %217
    %219 = vset.pattern.permute.xlu0 0
    %220 = vperm.xlu0 %219, %v75
    %v221 = vpop.permute.xlu0 %220
    %222 = vset.pattern.permute.xlu0 0
    %223 = vperm.xlu0 %222, %v76
    %v224 = vpop.permute.xlu0 %223
    %225 = vset.pattern.permute.xlu0 0
    %226 = vperm.xlu0 %225, %v77
    %v227 = vpop.permute.xlu0 %226
    %228 = vset.pattern.permute.xlu0 0
    %229 = vperm.xlu0 %228, %v78
    %v230 = vpop.permute.xlu0 %229
    %231 = vset.pattern.permute.xlu0 0
    %232 = vperm.xlu0 %231, %v79
    %v233 = vpop.permute.xlu0 %232
    %234 = vset.pattern.permute.xlu0 0
    %235 = vperm.xlu0 %234, %v80
    %v236 = vpop.permute.xlu0 %235
    %237 = vset.pattern.permute.xlu0 0
    %238 = vperm.xlu0 %237, %v81
    %v239 = vpop.permute.xlu0 %238
    %240 = vset.pattern.permute.xlu0 0
    %241 = vperm.xlu0 %240, %v82
    %v242 = vpop.permute.xlu0 %241
    %243 = vset.pattern.permute.xlu0 0
    %244 = vperm.xlu0 %243, %v83
    %v245 = vpop.permute.xlu0 %244
    %246 = vset.pattern.permute.xlu0 0
    %247 = vperm.xlu0 %246, %v84
    %v248 = vpop.permute.xlu0 %247
    %249 = vset.pattern.permute.xlu0 0
    %250 = vperm.xlu0 %249, %v85
    %v251 = vpop.permute.xlu0 %250
    %vm252 = vcmp.eq.s32.totalorder %v203, %v206
    %vm253 = vcmp.eq.s32.totalorder %v203, %v209
    %vm254 = vcmp.eq.s32.totalorder %v203, %v212
    %vm255 = vcmp.eq.s32.totalorder %v203, %v215
    %vm256 = vcmp.eq.s32.totalorder %v203, %v218
    %vm257 = vcmp.eq.s32.totalorder %v203, %v221
    %vm258 = vcmp.eq.s32.totalorder %v203, %v224
    %vm259 = vcmp.eq.s32.totalorder %v203, %v227
    %vm260 = vcmp.eq.s32.totalorder %v203, %v230
    %vm261 = vcmp.eq.s32.totalorder %v203, %v233
    %vm262 = vcmp.eq.s32.totalorder %v203, %v236
    %vm263 = vcmp.eq.s32.totalorder %v203, %v239
    %vm264 = vcmp.eq.s32.totalorder %v203, %v242
    %vm265 = vcmp.eq.s32.totalorder %v203, %v245
    %vm266 = vcmp.eq.s32.totalorder %v203, %v248
    %vm267 = vcmp.eq.s32.totalorder %v203, %v251
    %v268 = vsel %vm252, 1, 0
    %v269 = vsel %vm253, 1, 0
    %v270 = vsel %vm254, 1, 0
    %v271 = vsel %vm255, 1, 0
    %v272 = vsel %vm256, 1, 0
    %v273 = vsel %vm257, 1, 0
    %v274 = vsel %vm258, 1, 0
    %v275 = vsel %vm259, 1, 0
    %v276 = vsel %vm260, 1, 0
    %v277 = vsel %vm261, 1, 0
    %v278 = vsel %vm262, 1, 0
    %v279 = vsel %vm263, 1, 0
    %v280 = vsel %vm264, 1, 0
    %v281 = vsel %vm265, 1, 0
    %v282 = vsel %vm266, 1, 0
    %v283 = vsel %vm267, 1, 0
    %v284 = vcvt.s32.f32 %v268
    %v285 = vcvt.s32.f32 %v269
    %v286 = vcvt.s32.f32 %v270
    %v287 = vcvt.s32.f32 %v271
    %v288 = vcvt.s32.f32 %v272
    %v289 = vcvt.s32.f32 %v273
    %v290 = vcvt.s32.f32 %v274
    %v291 = vcvt.s32.f32 %v275
    %v292 = vcvt.s32.f32 %v276
    %v293 = vcvt.s32.f32 %v277
    %v294 = vcvt.s32.f32 %v278
    %v295 = vcvt.s32.f32 %v279
    %v296 = vcvt.s32.f32 %v280
    %v297 = vcvt.s32.f32 %v281
    %v298 = vcvt.s32.f32 %v282
    %v299 = vcvt.s32.f32 %v283
    %v300 = vpack.c.bf16 %v285, %v284
    %v301 = vpack.c.bf16 %v287, %v286
    %v302 = vpack.c.bf16 %v289, %v288
    %v303 = vpack.c.bf16 %v291, %v290
    %v304 = vpack.c.bf16 %v293, %v292
    %v305 = vpack.c.bf16 %v295, %v294
    %v306 = vpack.c.bf16 %v297, %v296
    %v307 = vpack.c.bf16 %v299, %v298
    %v308 = vld [vmem:[#allocation3] sm:$0xff]
    %v309 = vld [vmem:[#allocation3 + $0x8] sm:$0xff]
    %v310 = vpack.c.bf16 %v198, %v196
    %311 = vmatpush.bf16.msra.mxu0 %v307
    %312 = vmatpush.bf16.msra.mxu0 %v306
    %313 = vmatpush.bf16.msra.mxu0 %v305
    %314 = vmatpush.bf16.msra.mxu0 %v304
    %315 = vmatpush.bf16.msra.mxu0 %v303
    %316 = vmatpush.bf16.msra.mxu0 %v302
    %317 = vmatpush.bf16.msra.mxu0 %v301
    %318 = vmatpush.bf16.msra.mxu0 %v300
    %319 = vmatmul.bf16.gmra.mxu0 %v310
    %v320 = vpop.f32.mrf.mxu0
    %v321 = vadd.f32 0.0, %v320
    %v322 = vpop.f32.mrf.mxu0
    %v323 = vadd.f32 0.0, %v322
    %324 = vdwg.mxu0
    %v325 = vadd.f32 %v308, %v321
    %v326 = vadd.f32 %v309, %v323
    %327 = vst [vmem:[#allocation3] sm:$0xff] %v325
    %328 = vst [vmem:[#allocation3 + $0x8] sm:$0xff] %v326
    // Predicated region
    $region30: #{tpu_custom_call.1} parent=1 // pred_check
      %p329 = pneg %p24
    $region31: #{tpu_custom_call.1} parent=1 // pred_check_branch
      %331 = sbr.rel (%p329) target = $region33
    $region32: #{tpu_custom_call.1} parent=1 // pred_region
      %v332 = vld [vmem:[#allocation3] sm:$0xff]
      %v333 = vld [vmem:[#allocation3 + $0x8] sm:$0xff]
      %v334 = vadd.f32 %v332, %v333
      %v335 = vld [vmem:[%s5] sm:$0xff]
      %337 = vset.pattern.permute.xlu0 0
      %338 = vperm.xlu0 %337, %v335
      %v339 = vpop.permute.xlu0 %338
      %v341 = vadd.f32 %v334, %v339
      %342 = vst [vmem:[#allocation4] sm:$0xff] %v341
    $region33: #{tpu_custom_call.1} parent=1 // pred_fallthru
      _
    // Predicated region
    $region34: #{tpu_custom_call.1} parent=1 // pred_check
      _
    $region35: #{tpu_custom_call.1} parent=1 // pred_check_branch
      %344 = sbr.rel (0) target = $region37
    $region36: #{tpu_custom_call.1} parent=1 // pred_region
      %346 = vsyncadd [#allocation5], 0
      %s348 = sshll.u32 [#allocation4], 4
      %s349 = int_to_ptr.vmem [resolvable:$true] %s348
      %s350 = sshll.u32 %s6, 4
      %s351 = int_to_ptr.hbm [resolvable:$true] %s350
      %353 = dma.vmem_to_hbm [thread:$0]  %s349, 128, %s351, [#allocation5]
    $region37: #{tpu_custom_call.1} parent=1 // pred_fallthru
      _
    // Predicated region
    $region38: #{tpu_custom_call.1} parent=1 // pred_check
      _
    $region39: #{tpu_custom_call.1} parent=1 // pred_check_branch
      %355 = sbr.rel (0) target = $region41
    $region40: #{tpu_custom_call.1} parent=1 // pred_region
      %357 = dma.done [#allocation5], 128
    $region41: #{tpu_custom_call.1} parent=1 // pred_fallthru
      _
    %358 = vsyncpa [#allocation5], 1

</llo_original>
